<compile_context>
chip_gen: v6e
topology: v6e:2x2x1
jax: 0.10.0
libtpu: 0.0.40
codegen_flags: <defaults>
</compile_context>

<pallas_src>
import functools

import jax
import jax.numpy as jnp
from jax.experimental import pallas as pl
from jax.experimental.pallas import tpu as pltpu


def _round_up(n, m):
    return ((n + m - 1) // m) * m


def _pad2d(a, rows, cols):
    return jnp.pad(a, ((0, rows - a.shape[0]), (0, cols - a.shape[1])))


# ----------------------------------------------------------------------------
# Kernel 1: parameter merge (runs once per forward, single grid point).
#   coef_ref : [M] f32 in SMEM (scalar-prefetched), M = 1 + num_task_models
#   w1s_ref  : [M, Hin_p, Fp]  bf16 (pretrained first, then task models)
#   b1s_ref  : [M, 1, Fp]      bf16
#   w2s_ref  : [M, Fp, Out_p]  bf16
#   b2s_ref  : [M, 1, Out_p]   bf16
# Outputs: merged w1 (bf16), b1 (f32), w2 (bf16), b2 (f32).
# ----------------------------------------------------------------------------
def _merge_params_kernel(coef_ref, w1s_ref, b1s_ref, w2s_ref, b2s_ref,
                         w1_ref, b1_ref, w2_ref, b2_ref):
    num_models = w1s_ref.shape[0]  # static: K + 1

    def weighted_sum(stack_ref):
        acc = coef_ref[0] * stack_ref[0].astype(jnp.float32)
        # TODO(synk): switch to lax.fori_loop(..., unroll=True) if K grows large.
        for m in range(1, num_models):
            acc = acc + coef_ref[m] * stack_ref[m].astype(jnp.float32)
        return acc

    # Merge + store one tensor at a time -> short live ranges (no 4 accumulators
    # alive simultaneously).
    w1_ref[...] = weighted_sum(w1s_ref).astype(w1_ref.dtype)
    b1_ref[...] = weighted_sum(b1s_ref).astype(b1_ref.dtype)
    w2_ref[...] = weighted_sum(w2s_ref).astype(w2_ref.dtype)
    b2_ref[...] = weighted_sum(b2s_ref).astype(b2_ref.dtype)


def _merge_vmem_limit(num_models, hidden_p, ffn_p, out_p):
    in_bytes = num_models * (hidden_p * ffn_p + ffn_p * out_p
                             + ffn_p + out_p) * 2            # bf16 stacks
    out_bytes = (hidden_p * ffn_p + ffn_p * out_p) * 2 \
        + (ffn_p + out_p) * 4                                # merged params
    tmp_bytes = max(hidden_p * ffn_p, ffn_p * out_p) * 4     # f32 accumulator
    fp = 2 * (in_bytes + out_bytes) + tmp_bytes              # 2 pipeline buffers
    fp = int(fp * 1.5) + (2 << 20)
    return max(16 << 20, min(fp, 48 << 20))


@jax.jit
def merge_params(coef, w1s, b1s, w2s, b2s):
    num_models, hidden_p, ffn_p = w1s.shape
    out_p = w2s.shape[2]
    return pl.pallas_call(
        _merge_params_kernel,
        out_shape=(
            jax.ShapeDtypeStruct((hidden_p, ffn_p), jnp.bfloat16),
            jax.ShapeDtypeStruct((1, ffn_p), jnp.float32),
            jax.ShapeDtypeStruct((ffn_p, out_p), jnp.bfloat16),
            jax.ShapeDtypeStruct((1, out_p), jnp.float32),
        ),
        grid_spec=pltpu.PrefetchScalarGridSpec(
            num_scalar_prefetch=1,      # coef -> SMEM
            grid=(1,),
            in_specs=[
                pl.BlockSpec((num_models, hidden_p, ffn_p), lambda i, c: (0, 0, 0)),
                pl.BlockSpec((num_models, 1, ffn_p), lambda i, c: (0, 0, 0)),
                pl.BlockSpec((num_models, ffn_p, out_p), lambda i, c: (0, 0, 0)),
                pl.BlockSpec((num_models, 1, out_p), lambda i, c: (0, 0, 0)),
            ],
            out_specs=[
                pl.BlockSpec((hidden_p, ffn_p), lambda i, c: (0, 0)),
                pl.BlockSpec((1, ffn_p), lambda i, c: (0, 0)),
                pl.BlockSpec((ffn_p, out_p), lambda i, c: (0, 0)),
                pl.BlockSpec((1, out_p), lambda i, c: (0, 0)),
            ],
        ),
        compiler_params=pltpu.CompilerParams(
            dimension_semantics=("arbitrary",),
            vmem_limit_bytes=_merge_vmem_limit(num_models, hidden_p, ffn_p, out_p),
        ),
        # TODO(synk): tile the merge over weight rows for very large layers so the
        # full M-stack never has to be VMEM-resident at once.
    )(coef, w1s, b1s, w2s, b2s)


# ----------------------------------------------------------------------------
# Kernel 2: batch-tiled MLP forward on the merged parameters (bf16 MXU, f32 acc).
#   x_ref  : [TB, Hin_p]  bf16
#   w1_ref : [Hin_p, Fp]  bf16   b1_ref : [1, Fp]    f32
#   w2_ref : [Fp, Out_p]  bf16   b2_ref : [1, Out_p] f32
#   o_ref  : [TB, Out_p]  f32
# ----------------------------------------------------------------------------
def _mlp_fwd_kernel(x_ref, w1_ref, b1_ref, w2_ref, b2_ref, o_ref):
    h = jnp.dot(x_ref[...], w1_ref[...], preferred_element_type=jnp.float32)
    h = jnp.maximum(h + b1_ref[...], 0.0)
    y = jnp.dot(h.astype(jnp.bfloat16), w2_ref[...],
                preferred_element_type=jnp.float32)
    o_ref[...] = (y + b2_ref[...]).astype(o_ref.dtype)


def _forward_vmem_bytes(tb, hidden_p, ffn_p, out_p):
    # 2 pipeline buffers per operand/result.
    fp = 2 * ((hidden_p * ffn_p + ffn_p * out_p) * 2   # merged weights (bf16, invariant)
              + (ffn_p + out_p) * 4                    # merged biases (f32)
              + tb * hidden_p * 2                      # x tile (bf16)
              + tb * out_p * 4)                        # out tile (f32)
    fp += tb * ffn_p * 4                               # f32 hidden activations
    return fp


def _forward_vmem_limit(tb, hidden_p, ffn_p, out_p):
    fp = int(_forward_vmem_bytes(tb, hidden_p, ffn_p, out_p) * 1.5) + (2 << 20)
    # Realistic request: floor at 16 MiB, cap well under v7x's 64 MiB physical VMEM.
    return max(16 << 20, min(fp, 48 << 20))


@functools.partial(jax.jit, static_argnames=("tb",))
def merged_mlp_forward(x, w1, b1, w2, b2, *, tb):
    batch_p, hidden_p = x.shape
    ffn_p = w1.shape[1]
    out_p = w2.shape[1]
    grid = (batch_p // tb,)
    return pl.pallas_call(
        _mlp_fwd_kernel,
        out_shape=jax.ShapeDtypeStruct((batch_p, out_p), jnp.float32),
        grid_spec=pltpu.PrefetchScalarGridSpec(
            num_scalar_prefetch=0,
            grid=grid,
            in_specs=[
                pl.BlockSpec((tb, hidden_p), lambda i: (i, 0)),      # x tile
                pl.BlockSpec((hidden_p, ffn_p), lambda i: (0, 0)),   # merged w1 (resident)
                pl.BlockSpec((1, ffn_p), lambda i: (0, 0)),          # merged b1
                pl.BlockSpec((ffn_p, out_p), lambda i: (0, 0)),      # merged w2 (resident)
                pl.BlockSpec((1, out_p), lambda i: (0, 0)),          # merged b2
            ],
            out_specs=pl.BlockSpec((tb, out_p), lambda i: (i, 0)),
        ),
        compiler_params=pltpu.CompilerParams(
            # Batch tiles are independent -> split across TensorCores on v7x.
            dimension_semantics=("parallel",),
            vmem_limit_bytes=_forward_vmem_limit(tb, hidden_p, ffn_p, out_p),
        ),
    )(x, w1, b1, w2, b2)


# ----------------------------------------------------------------------------
# MergedModel wrapper: pre-transpose / pre-pad / pre-stack parameters once.
# ----------------------------------------------------------------------------
class MergedModelPallas:
    def __init__(self, pretrained_params, task_models_params, granularity="taskwise"):
        # TODO(synk): layerwise/elementwise alpha granularities and turn_on_layer
        # (training-time knobs) are not wired up.
        assert granularity == "taskwise"
        self.num_models = len(task_models_params)
        # One scalar alpha per task model, init 0.5 (matches nn.Parameter(torch.tensor(0.5))).
        self.alphas = jnp.full((self.num_models,), 0.5, dtype=jnp.float32)

        w1 = pretrained_params["fc1.weight"]
        w2 = pretrained_params["fc2.weight"]
        self.hidden = w1.shape[1]
        self.ffn = w1.shape[0]
        self.out_dim = w2.shape[0]
        self.hidden_p = _round_up(self.hidden, 128)
        self.ffn_p = _round_up(self.ffn, 128)
        self.out_p = _round_up(self.out_dim, 128)

        # Stack pretrained (index 0) + task models; transpose to [in, out], zero-pad
        # to 128-aligned feature dims, and store in bf16 ONCE (not per forward call).
        all_params = [pretrained_params] + list(task_models_params)
        self.w1s = jnp.stack([_pad2d(p["fc1.weight"].T, self.hidden_p, self.ffn_p)
                              for p in all_params]).astype(jnp.bfloat16)
        self.b1s = jnp.stack([_pad2d(p["fc1.bias"].reshape(1, -1), 1, self.ffn_p)
                              for p in all_params]).astype(jnp.bfloat16)
        self.w2s = jnp.stack([_pad2d(p["fc2.weight"].T, self.ffn_p, self.out_p)
                              for p in all_params]).astype(jnp.bfloat16)
        self.b2s = jnp.stack([_pad2d(p["fc2.bias"].reshape(1, -1), 1, self.out_p)
                              for p in all_params]).astype(jnp.bfloat16)

    def merge_coefficients(self):
        # merged = (1 - sum(alpha)) * pretrained + sum_k alpha_k * task_k
        c0 = (1.0 - jnp.sum(self.alphas)).reshape(1)
        return jnp.concatenate([c0, self.alphas]).astype(jnp.float32)

    def _pick_batch_tile(self, batch):
        batch8 = _round_up(max(batch, 1), 8)
        # Up to 512 rows fills the 256-wide MXU on v6e/v7x twice over; v5e's
        # 4x128x128 MXU is already filled at 128.  Shrink if the forward VMEM
        # footprint would exceed a v7x-safe (~40 MiB of 64 MiB) budget.
        tb = min(batch8, 512)
        while tb > 8 and _forward_vmem_bytes(tb, self.hidden_p, self.ffn_p,
                                             self.out_p) > (40 << 20):
            tb = max(8, _round_up(tb // 2, 8))
        batch_p = _round_up(batch8, tb)
        return tb, batch_p

    def __call__(self, x):
        # 1) merge parameters ONCE per forward (single-block kernel).
        w1, b1, w2, b2 = merge_params(self.merge_coefficients(),
                                      self.w1s, self.b1s, self.w2s, self.b2s)
        # 2) batch-gridded forward on the single merged copy.
        batch = x.shape[0]
        tb, batch_p = self._pick_batch_tile(batch)
        x_p = jnp.pad(x.astype(jnp.bfloat16),
                      ((0, batch_p - batch), (0, self.hidden_p - x.shape[1])))
        y_p = merged_mlp_forward(x_p, w1, b1, w2, b2, tb=tb)
        return y_p[:batch, :self.out_dim]


# ----------------------------------------------------------------------------
# Main: deterministic small-shape example + pure-JAX reference check.
# ----------------------------------------------------------------------------
if __name__ == "__main__":
    key = jax.random.PRNGKey(0)
    batch, hidden, ffn, out_dim = 8, 32, 64, 32
    num_task_models = 2

    def init_mlp(k):
        k1, k2, k3, k4 = jax.random.split(k, 4)
        return {
            "fc1.weight": jax.random.normal(k1, (ffn, hidden), jnp.float32) * 0.05,
            "fc1.bias":   jax.random.normal(k2, (ffn,), jnp.float32) * 0.05,
            "fc2.weight": jax.random.normal(k3, (out_dim, ffn), jnp.float32) * 0.05,
            "fc2.bias":   jax.random.normal(k4, (out_dim,), jnp.float32) * 0.05,
        }

    kp, k0, k1, kx = jax.random.split(key, 4)
    pretrained = init_mlp(kp)
    task_models = [init_mlp(k0), init_mlp(k1)]
    x = jax.random.normal(kx, (batch, hidden), jnp.float32)

    model = MergedModelPallas(pretrained, task_models, granularity="taskwise")
    # Non-trivial alphas so the pretrained coefficient (1 - sum(alpha)) is exercised.
    model.alphas = jnp.array([0.3, 0.45], dtype=jnp.float32)

    y = model(x)
    y = jax.block_until_ready(y)

    # pure-JAX f32 reference (original PyTorch formulation)
    def ref_forward(x, pretrained, task_models, alphas):
        merged = {}
        for name, pre in pretrained.items():
            p = pre
            for k in range(len(task_models)):
                p = p + alphas[k] * (task_models[k][name] - pre)
            merged[name] = p
        h = jnp.maximum(x @ merged["fc1.weight"].T + merged["fc1.bias"], 0.0)
        return h @ merged["fc2.weight"].T + merged["fc2.bias"]

    y_ref = ref_forward(x, pretrained, task_models, model.alphas)
    assert y.shape == (batch, out_dim)
    # Tolerance loosened vs. the f32 version: params/x/MXU operands are bf16
    # (f32 accumulation), so expect ~1e-3-level absolute differences.
    assert jnp.allclose(y, y_ref, atol=2e-2, rtol=2e-2), "mismatch vs reference"

    print("KERNEL_OK")
</pallas_src>

<mosaic_0001>
module attributes {stable_mosaic.version = 11 : i64} {
  func.func @_merge_params_kernel(%arg0: i32, %arg1: memref<3xf32, #tpu.memory_space<smem>>, %arg2: memref<3x128x128xbf16, #tpu.memory_space<vmem>>, %arg3: memref<3x1x128xbf16, #tpu.memory_space<vmem>>, %arg4: memref<3x128x128xbf16, #tpu.memory_space<vmem>>, %arg5: memref<3x1x128xbf16, #tpu.memory_space<vmem>>, %arg6: memref<128x128xbf16, #tpu.memory_space<vmem>>, %arg7: memref<1x128xf32, #tpu.memory_space<vmem>>, %arg8: memref<128x128xbf16, #tpu.memory_space<vmem>>, %arg9: memref<1x128xf32, #tpu.memory_space<vmem>>) attributes {dimension_semantics = [#tpu.dimension_semantics<arbitrary>], iteration_bounds = array<i64: 1>, scalar_prefetch = 1 : i64, scratch_operands = 0 : i64, tpu.core_type = #tpu.core_type<tc>, window_params = [{pipeline_mode = #tpu.pipeline_mode<synchronous>, transform_indices = @transform_0, window_bounds = array<i64: 3, 128, 128>}, {pipeline_mode = #tpu.pipeline_mode<synchronous>, transform_indices = @transform_1, window_bounds = array<i64: 3, 1, 128>}, {pipeline_mode = #tpu.pipeline_mode<synchronous>, transform_indices = @transform_2, window_bounds = array<i64: 3, 128, 128>}, {pipeline_mode = #tpu.pipeline_mode<synchronous>, transform_indices = @transform_3, window_bounds = array<i64: 3, 1, 128>}, {pipeline_mode = #tpu.pipeline_mode<synchronous>, transform_indices = @transform_4, window_bounds = array<i64: 128, 128>}, {pipeline_mode = #tpu.pipeline_mode<synchronous>, transform_indices = @transform_5, window_bounds = array<i64: 1, 128>}, {pipeline_mode = #tpu.pipeline_mode<synchronous>, transform_indices = @transform_6, window_bounds = array<i64: 128, 128>}, {pipeline_mode = #tpu.pipeline_mode<synchronous>, transform_indices = @transform_7, window_bounds = array<i64: 1, 128>}]} {
    %c0 = arith.constant 0 : index
    %0 = memref.load %arg1[%c0] : memref<3xf32, #tpu.memory_space<smem>>
    %c0_0 = arith.constant 0 : index
    %c0_1 = arith.constant 0 : index
    %c0_2 = arith.constant 0 : index
    %1 = vector.load %arg2[%c0_0, %c0_1, %c0_2] : memref<3x128x128xbf16, #tpu.memory_space<vmem>>, vector<1x128x128xbf16>
    %2 = vector.shape_cast %1 : vector<1x128x128xbf16> to vector<128x128xbf16>
    %3 = arith.extf %2 : vector<128x128xbf16> to vector<128x128xf32>
    %4 = vector.broadcast %0 : f32 to vector<128x128xf32>
    %5 = arith.mulf %4, %3 : vector<128x128xf32>
    %c1 = arith.constant 1 : index
    %6 = memref.load %arg1[%c1] : memref<3xf32, #tpu.memory_space<smem>>
    %c1_3 = arith.constant 1 : index
    %c0_4 = arith.constant 0 : index
    %c0_5 = arith.constant 0 : index
    %7 = vector.load %arg2[%c1_3, %c0_4, %c0_5] : memref<3x128x128xbf16, #tpu.memory_space<vmem>>, vector<1x128x128xbf16>
    %8 = vector.shape_cast %7 : vector<1x128x128xbf16> to vector<128x128xbf16>
    %9 = arith.extf %8 : vector<128x128xbf16> to vector<128x128xf32>
    %10 = vector.broadcast %6 : f32 to vector<128x128xf32>
    %11 = arith.mulf %10, %9 : vector<128x128xf32>
    %12 = arith.addf %5, %11 : vector<128x128xf32>
    %c2 = arith.constant 2 : index
    %13 = memref.load %arg1[%c2] : memref<3xf32, #tpu.memory_space<smem>>
    %c2_6 = arith.constant 2 : index
    %c0_7 = arith.constant 0 : index
    %c0_8 = arith.constant 0 : index
    %14 = vector.load %arg2[%c2_6, %c0_7, %c0_8] : memref<3x128x128xbf16, #tpu.memory_space<vmem>>, vector<1x128x128xbf16>
    %15 = vector.shape_cast %14 : vector<1x128x128xbf16> to vector<128x128xbf16>
    %16 = arith.extf %15 : vector<128x128xbf16> to vector<128x128xf32>
    %17 = vector.broadcast %13 : f32 to vector<128x128xf32>
    %18 = arith.mulf %17, %16 : vector<128x128xf32>
    %19 = arith.addf %12, %18 : vector<128x128xf32>
    %20 = arith.truncf %19 : vector<128x128xf32> to vector<128x128xbf16>
    %c0_9 = arith.constant 0 : index
    %c0_10 = arith.constant 0 : index
    %21 = vector.load %arg6[%c0_9, %c0_10] : memref<128x128xbf16, #tpu.memory_space<vmem>>, vector<128x128xbf16>
    tpu.vector_store %arg6[%c0_9, %c0_10], %20 {strides = array<i32>} : memref<128x128xbf16, #tpu.memory_space<vmem>>, vector<128x128xbf16>,
    %c0_11 = arith.constant 0 : index
    %22 = memref.load %arg1[%c0_11] : memref<3xf32, #tpu.memory_space<smem>>
    %c0_12 = arith.constant 0 : index
    %c0_13 = arith.constant 0 : index
    %c0_14 = arith.constant 0 : index
    %23 = vector.load %arg3[%c0_12, %c0_13, %c0_14] : memref<3x1x128xbf16, #tpu.memory_space<vmem>>, vector<1x1x128xbf16>
    %24 = vector.shape_cast %23 : vector<1x1x128xbf16> to vector<1x128xbf16>
    %25 = arith.extf %24 : vector<1x128xbf16> to vector<1x128xf32>
    %26 = vector.broadcast %22 : f32 to vector<1x128xf32>
    %27 = arith.mulf %26, %25 : vector<1x128xf32>
    %c1_15 = arith.constant 1 : index
    %28 = memref.load %arg1[%c1_15] : memref<3xf32, #tpu.memory_space<smem>>
    %c1_16 = arith.constant 1 : index
    %c0_17 = arith.constant 0 : index
    %c0_18 = arith.constant 0 : index
    %29 = vector.load %arg3[%c1_16, %c0_17, %c0_18] : memref<3x1x128xbf16, #tpu.memory_space<vmem>>, vector<1x1x128xbf16>
    %30 = vector.shape_cast %29 : vector<1x1x128xbf16> to vector<1x128xbf16>
    %31 = arith.extf %30 : vector<1x128xbf16> to vector<1x128xf32>
    %32 = vector.broadcast %28 : f32 to vector<1x128xf32>
    %33 = arith.mulf %32, %31 : vector<1x128xf32>
    %34 = arith.addf %27, %33 : vector<1x128xf32>
    %c2_19 = arith.constant 2 : index
    %35 = memref.load %arg1[%c2_19] : memref<3xf32, #tpu.memory_space<smem>>
    %c2_20 = arith.constant 2 : index
    %c0_21 = arith.constant 0 : index
    %c0_22 = arith.constant 0 : index
    %36 = vector.load %arg3[%c2_20, %c0_21, %c0_22] : memref<3x1x128xbf16, #tpu.memory_space<vmem>>, vector<1x1x128xbf16>
    %37 = vector.shape_cast %36 : vector<1x1x128xbf16> to vector<1x128xbf16>
    %38 = arith.extf %37 : vector<1x128xbf16> to vector<1x128xf32>
    %39 = vector.broadcast %35 : f32 to vector<1x128xf32>
    %40 = arith.mulf %39, %38 : vector<1x128xf32>
    %41 = arith.addf %34, %40 : vector<1x128xf32>
    %c0_23 = arith.constant 0 : index
    %c0_24 = arith.constant 0 : index
    %42 = vector.load %arg7[%c0_23, %c0_24] : memref<1x128xf32, #tpu.memory_space<vmem>>, vector<1x128xf32>
    tpu.vector_store %arg7[%c0_23, %c0_24], %41 {strides = array<i32>} : memref<1x128xf32, #tpu.memory_space<vmem>>, vector<1x128xf32>,
    %c0_25 = arith.constant 0 : index
    %43 = memref.load %arg1[%c0_25] : memref<3xf32, #tpu.memory_space<smem>>
    %c0_26 = arith.constant 0 : index
    %c0_27 = arith.constant 0 : index
    %c0_28 = arith.constant 0 : index
    %44 = vector.load %arg4[%c0_26, %c0_27, %c0_28] : memref<3x128x128xbf16, #tpu.memory_space<vmem>>, vector<1x128x128xbf16>
    %45 = vector.shape_cast %44 : vector<1x128x128xbf16> to vector<128x128xbf16>
    %46 = arith.extf %45 : vector<128x128xbf16> to vector<128x128xf32>
    %47 = vector.broadcast %43 : f32 to vector<128x128xf32>
    %48 = arith.mulf %47, %46 : vector<128x128xf32>
    %c1_29 = arith.constant 1 : index
    %49 = memref.load %arg1[%c1_29] : memref<3xf32, #tpu.memory_space<smem>>
    %c1_30 = arith.constant 1 : index
    %c0_31 = arith.constant 0 : index
    %c0_32 = arith.constant 0 : index
    %50 = vector.load %arg4[%c1_30, %c0_31, %c0_32] : memref<3x128x128xbf16, #tpu.memory_space<vmem>>, vector<1x128x128xbf16>
    %51 = vector.shape_cast %50 : vector<1x128x128xbf16> to vector<128x128xbf16>
    %52 = arith.extf %51 : vector<128x128xbf16> to vector<128x128xf32>
    %53 = vector.broadcast %49 : f32 to vector<128x128xf32>
    %54 = arith.mulf %53, %52 : vector<128x128xf32>
    %55 = arith.addf %48, %54 : vector<128x128xf32>
    %c2_33 = arith.constant 2 : index
    %56 = memref.load %arg1[%c2_33] : memref<3xf32, #tpu.memory_space<smem>>
    %c2_34 = arith.constant 2 : index
    %c0_35 = arith.constant 0 : index
    %c0_36 = arith.constant 0 : index
    %57 = vector.load %arg4[%c2_34, %c0_35, %c0_36] : memref<3x128x128xbf16, #tpu.memory_space<vmem>>, vector<1x128x128xbf16>
    %58 = vector.shape_cast %57 : vector<1x128x128xbf16> to vector<128x128xbf16>
    %59 = arith.extf %58 : vector<128x128xbf16> to vector<128x128xf32>
    %60 = vector.broadcast %56 : f32 to vector<128x128xf32>
    %61 = arith.mulf %60, %59 : vector<128x128xf32>
    %62 = arith.addf %55, %61 : vector<128x128xf32>
    %63 = arith.truncf %62 : vector<128x128xf32> to vector<128x128xbf16>
    %c0_37 = arith.constant 0 : index
    %c0_38 = arith.constant 0 : index
    %64 = vector.load %arg8[%c0_37, %c0_38] : memref<128x128xbf16, #tpu.memory_space<vmem>>, vector<128x128xbf16>
    tpu.vector_store %arg8[%c0_37, %c0_38], %63 {strides = array<i32>} : memref<128x128xbf16, #tpu.memory_space<vmem>>, vector<128x128xbf16>,
    %c0_39 = arith.constant 0 : index
    %65 = memref.load %arg1[%c0_39] : memref<3xf32, #tpu.memory_space<smem>>
    %c0_40 = arith.constant 0 : index
    %c0_41 = arith.constant 0 : index
    %c0_42 = arith.constant 0 : index
    %66 = vector.load %arg5[%c0_40, %c0_41, %c0_42] : memref<3x1x128xbf16, #tpu.memory_space<vmem>>, vector<1x1x128xbf16>
    %67 = vector.shape_cast %66 : vector<1x1x128xbf16> to vector<1x128xbf16>
    %68 = arith.extf %67 : vector<1x128xbf16> to vector<1x128xf32>
    %69 = vector.broadcast %65 : f32 to vector<1x128xf32>
    %70 = arith.mulf %69, %68 : vector<1x128xf32>
    %c1_43 = arith.constant 1 : index
    %71 = memref.load %arg1[%c1_43] : memref<3xf32, #tpu.memory_space<smem>>
    %c1_44 = arith.constant 1 : index
    %c0_45 = arith.constant 0 : index
    %c0_46 = arith.constant 0 : index
    %72 = vector.load %arg5[%c1_44, %c0_45, %c0_46] : memref<3x1x128xbf16, #tpu.memory_space<vmem>>, vector<1x1x128xbf16>
    %73 = vector.shape_cast %72 : vector<1x1x128xbf16> to vector<1x128xbf16>
    %74 = arith.extf %73 : vector<1x128xbf16> to vector<1x128xf32>
    %75 = vector.broadcast %71 : f32 to vector<1x128xf32>
    %76 = arith.mulf %75, %74 : vector<1x128xf32>
    %77 = arith.addf %70, %76 : vector<1x128xf32>
    %c2_47 = arith.constant 2 : index
    %78 = memref.load %arg1[%c2_47] : memref<3xf32, #tpu.memory_space<smem>>
    %c2_48 = arith.constant 2 : index
    %c0_49 = arith.constant 0 : index
    %c0_50 = arith.constant 0 : index
    %79 = vector.load %arg5[%c2_48, %c0_49, %c0_50] : memref<3x1x128xbf16, #tpu.memory_space<vmem>>, vector<1x1x128xbf16>
    %80 = vector.shape_cast %79 : vector<1x1x128xbf16> to vector<1x128xbf16>
    %81 = arith.extf %80 : vector<1x128xbf16> to vector<1x128xf32>
    %82 = vector.broadcast %78 : f32 to vector<1x128xf32>
    %83 = arith.mulf %82, %81 : vector<1x128xf32>
    %84 = arith.addf %77, %83 : vector<1x128xf32>
    %c0_51 = arith.constant 0 : index
    %c0_52 = arith.constant 0 : index
    %85 = vector.load %arg9[%c0_51, %c0_52] : memref<1x128xf32, #tpu.memory_space<vmem>>, vector<1x128xf32>
    tpu.vector_store %arg9[%c0_51, %c0_52], %84 {strides = array<i32>} : memref<1x128xf32, #tpu.memory_space<vmem>>, vector<1x128xf32>,
    return
  }
  func.func @transform_0(%arg0: i32, %arg1: memref<3xf32, #tpu.memory_space<smem>>) -> (i32, i32, i32) {
    %c0_i32 = arith.constant 0 : i32
    %c0_i32_0 = arith.constant 0 : i32
    %c0_i32_1 = arith.constant 0 : i32
    %c0_i32_2 = arith.constant 0 : i32
    return %c0_i32, %c0_i32_0, %c0_i32_1 : i32, i32, i32
  }
  func.func @transform_1(%arg0: i32, %arg1: memref<3xf32, #tpu.memory_space<smem>>) -> (i32, i32, i32) {
    %c0_i32 = arith.constant 0 : i32
    %c0_i32_0 = arith.constant 0 : i32
    %c0_i32_1 = arith.constant 0 : i32
    %c0_i32_2 = arith.constant 0 : i32
    return %c0_i32, %c0_i32_0, %c0_i32_1 : i32, i32, i32
  }
  func.func @transform_2(%arg0: i32, %arg1: memref<3xf32, #tpu.memory_space<smem>>) -> (i32, i32, i32) {
    %c0_i32 = arith.constant 0 : i32
    %c0_i32_0 = arith.constant 0 : i32
    %c0_i32_1 = arith.constant 0 : i32
    %c0_i32_2 = arith.constant 0 : i32
    return %c0_i32, %c0_i32_0, %c0_i32_1 : i32, i32, i32
  }
  func.func @transform_3(%arg0: i32, %arg1: memref<3xf32, #tpu.memory_space<smem>>) -> (i32, i32, i32) {
    %c0_i32 = arith.constant 0 : i32
    %c0_i32_0 = arith.constant 0 : i32
    %c0_i32_1 = arith.constant 0 : i32
    %c0_i32_2 = arith.constant 0 : i32
    return %c0_i32, %c0_i32_0, %c0_i32_1 : i32, i32, i32
  }
  func.func @transform_4(%arg0: i32, %arg1: memref<3xf32, #tpu.memory_space<smem>>) -> (i32, i32) {
    %c0_i32 = arith.constant 0 : i32
    %c0_i32_0 = arith.constant 0 : i32
    %c0_i32_1 = arith.constant 0 : i32
    return %c0_i32, %c0_i32_0 : i32, i32
  }
  func.func @transform_5(%arg0: i32, %arg1: memref<3xf32, #tpu.memory_space<smem>>) -> (i32, i32) {
    %c0_i32 = arith.constant 0 : i32
    %c0_i32_0 = arith.constant 0 : i32
    %c0_i32_1 = arith.constant 0 : i32
    return %c0_i32, %c0_i32_0 : i32, i32
  }
  func.func @transform_6(%arg0: i32, %arg1: memref<3xf32, #tpu.memory_space<smem>>) -> (i32, i32) {
    %c0_i32 = arith.constant 0 : i32
    %c0_i32_0 = arith.constant 0 : i32
    %c0_i32_1 = arith.constant 0 : i32
    return %c0_i32, %c0_i32_0 : i32, i32
  }
  func.func @transform_7(%arg0: i32, %arg1: memref<3xf32, #tpu.memory_space<smem>>) -> (i32, i32) {
    %c0_i32 = arith.constant 0 : i32
    %c0_i32_0 = arith.constant 0 : i32
    %c0_i32_1 = arith.constant 0 : i32
    return %c0_i32, %c0_i32_0 : i32, i32
  }
}

</mosaic_0001>

<llo_original>
// kernel: merge_params.1
$region0: #{merge_params.1}
  #allocation0 [shape = 'u32[]', space=smem, size = 0x4, offset = 0x4, fixed_abs, tag = 'smem constant byte address 0x4 - core index']
  #allocation1 [shape = 'u32[144,128]{1,0:T(1,128)}', space=vmem, size = 0x12000, scoped, tag = 'internal scratch']
  #allocation2 [shape = 's32[1]{0}', space=sflag, size = 0x4, scoped, tag = 'scoped memory for merge_params.1']
  #allocation3 [shape = 'u8[512]{0}', space=smem, size = 0x200, scoped, tag = 'prefetched SMEM operand 0']
  %s0 = inlined_call_operand.vmem [shape: f32[3], index: 0, kind: input, shape index: {}]
  %s1 = inlined_call_operand.hbm [shape: bf16[3,128,128], index: 1, kind: input, shape index: {}]
  %s2 = inlined_call_operand.vmem [shape: bf16[3,1,128], index: 2, kind: input, shape index: {}]
  %s3 = inlined_call_operand.hbm [shape: bf16[3,128,128], index: 3, kind: input, shape index: {}]
  %s4 = inlined_call_operand.vmem [shape: bf16[3,1,128], index: 4, kind: input, shape index: {}]
  %s5 = inlined_call_operand.hbm [shape: bf16[128,128], index: 5, kind: output, shape index: {0}]
  %s6 = inlined_call_operand.hbm [shape: f32[1,128], index: 6, kind: output, shape index: {1}]
  %s7 = inlined_call_operand.hbm [shape: bf16[128,128], index: 7, kind: output, shape index: {2}]
  %s8 = inlined_call_operand.hbm [shape: f32[1,128], index: 8, kind: output, shape index: {3}]
  %9 = xla_tuple %s5, %s6, %s7, %s8
  %s10 = sld [smem:[#allocation0]]
  $region58: #{merge_params.1} parent=0
    _
  %s12 = ssub.s32 1, %s10
  %s13 = scalar_select 0, %s12, %s10
  %s14 = sshll.u32 %s0, 4
  %s15 = int_to_ptr.vmem [resolvable:$true] %s14
  %17 = dma.vmem_to_smem %s15, 16, [#allocation3], [#allocation2]
  %18 = dma.done [#allocation2], 16
  %19 = sfence
  $region1: #{merge_params.1} parent=0
    #allocation4 [shape = 'u8[98304]{0}', space=vmem, size = 0x18000, scoped, tag = 'input window, operand 1, single buffered']
    #allocation5 [shape = 's32[1]{0}', space=sflag, size = 0x4, scoped, tag = 'scoped memory for merge_params.1']
    #allocation6 [shape = 's32[1]{0}', space=sflag, size = 0x4, scoped, tag = 'scoped memory for merge_params.1']
    #allocation7 [shape = 'u8[98304]{0}', space=vmem, size = 0x18000, scoped, tag = 'input window, operand 3, single buffered']
    #allocation8 [shape = 's32[1]{0}', space=sflag, size = 0x4, scoped, tag = 'scoped memory for merge_params.1']
    #allocation9 [shape = 'u8[32768]{0}', space=vmem, size = 0x8000, scoped, tag = 'output window, operand 0, single buffered']
    #allocation10 [shape = 'u8[512]{0}', space=vmem, size = 0x400, scoped, tag = 'output window, operand 1, single buffered']
    #allocation11 [shape = 's32[1]{0}', space=sflag, size = 0x4, scoped, tag = 'scoped memory for merge_params.1']
    #allocation12 [shape = 'u8[32768]{0}', space=vmem, size = 0x8000, scoped, tag = 'output window, operand 2, single buffered']
    #allocation13 [shape = 'u8[512]{0}', space=vmem, size = 0x400, scoped, tag = 'output window, operand 3, single buffered']
    #allocation14 [shape = 's32[1]{0}', space=sflag, size = 0x4, scoped, tag = 'scoped memory for merge_params.1']
    %20 = vsyncpa [#allocation5], 0
    %21 = vsyncpa [#allocation8], 0
    %22 = vsyncpa [#allocation6], 0
    %23 = vsyncpa [#allocation11], 0
    %24 = vsyncpa [#allocation14], 0
    // Predicated region
    $region2: #{merge_params.1} parent=1 // pred_check
      _
    $region3: #{merge_params.1} parent=1 // pred_check_branch
      %26 = sbr.rel (0) target = $region5
    $region4: #{merge_params.1} parent=1 // pred_region
      %s28 = ssub.s32 3072, 3072
      %29 = vsyncadd [#allocation5], %s28
      %s30 = sshll.u32 [#allocation4], 4
      %s31 = int_to_ptr.vmem [resolvable:$true] %s30
      %36 = dma.hbm_to_vmem [thread:$0]  %s1, 3072, %s31, [#allocation5], 64, 64, 4
    $region5: #{merge_params.1} parent=1 // pred_fallthru
      _
    // Predicated region
    $region6: #{merge_params.1} parent=1 // pred_check
      _
    $region7: #{merge_params.1} parent=1 // pred_check_branch
      %38 = sbr.rel (0) target = $region9
    $region8: #{merge_params.1} parent=1 // pred_region
      _
    $region9: #{merge_params.1} parent=1 // pred_fallthru
      _
    // Predicated region
    $region10: #{merge_params.1} parent=1 // pred_check
      _
    $region11: #{merge_params.1} parent=1 // pred_check_branch
      %40 = sbr.rel (0) target = $region13
    $region12: #{merge_params.1} parent=1 // pred_region
      %s42 = ssub.s32 3072, 3072
      %43 = vsyncadd [#allocation8], %s42
      %s44 = sshll.u32 [#allocation7], 4
      %s45 = int_to_ptr.vmem [resolvable:$true] %s44
      %50 = dma.hbm_to_vmem [thread:$0]  %s3, 3072, %s45, [#allocation8], 64, 64, 4
    $region13: #{merge_params.1} parent=1 // pred_fallthru
      _
    // Predicated region
    $region14: #{merge_params.1} parent=1 // pred_check
      _
    $region15: #{merge_params.1} parent=1 // pred_check_branch
      %52 = sbr.rel (0) target = $region17
    $region16: #{merge_params.1} parent=1 // pred_region
      _
    $region17: #{merge_params.1} parent=1 // pred_fallthru
      _
    // Predicated region
    $region18: #{merge_params.1} parent=1 // pred_check
      _
    $region19: #{merge_params.1} parent=1 // pred_check_branch
      %54 = sbr.rel (0) target = $region21
    $region20: #{merge_params.1} parent=1 // pred_region
      %55 = dma.done [#allocation5], 3072
    $region21: #{merge_params.1} parent=1 // pred_fallthru
      _
    // Predicated region
    $region22: #{merge_params.1} parent=1 // pred_check
      _
    $region23: #{merge_params.1} parent=1 // pred_check_branch
      %57 = sbr.rel (0) target = $region25
    $region24: #{merge_params.1} parent=1 // pred_region
      %58 = dma.done [#allocation8], 3072
    $region25: #{merge_params.1} parent=1 // pred_fallthru
      _
    %s59 = sld [smem:[#allocation3]]
    %v60 = vld [vmem:[#allocation4] sm:$0xf]
    %v61 = vld [vmem:[#allocation4 + $0x4] sm:$0xf]
    %v62 = vld [vmem:[#allocation4 + $0x8] sm:$0xf]
    %v63 = vld [vmem:[#allocation4 + $0xc] sm:$0xf]
    %v64 = vld [vmem:[#allocation4 + $0x10] sm:$0xf]
    %v65 = vld [vmem:[#allocation4 + $0x14] sm:$0xf]
    %v66 = vld [vmem:[#allocation4 + $0x18] sm:$0xf]
    %v67 = vld [vmem:[#allocation4 + $0x1c] sm:$0xf]
    %v68 = vld [vmem:[#allocation4 + $0x20] sm:$0xf]
    %v69 = vld [vmem:[#allocation4 + $0x24] sm:$0xf]
    %v70 = vld [vmem:[#allocation4 + $0x28] sm:$0xf]
    %v71 = vld [vmem:[#allocation4 + $0x2c] sm:$0xf]
    %v72 = vld [vmem:[#allocation4 + $0x30] sm:$0xf]
    %v73 = vld [vmem:[#allocation4 + $0x34] sm:$0xf]
    %v74 = vld [vmem:[#allocation4 + $0x38] sm:$0xf]
    %v75 = vld [vmem:[#allocation4 + $0x3c] sm:$0xf]
    %v76 = vunpack.c.l.bf16 %v60
    %v77 = vunpack.c.l.bf16 %v61
    %v78 = vunpack.c.l.bf16 %v62
    %v79 = vunpack.c.l.bf16 %v63
    %v80 = vunpack.c.l.bf16 %v64
    %v81 = vunpack.c.l.bf16 %v65
    %v82 = vunpack.c.l.bf16 %v66
    %v83 = vunpack.c.l.bf16 %v67
    %v84 = vunpack.c.l.bf16 %v68
    %v85 = vunpack.c.l.bf16 %v69
    %v86 = vunpack.c.l.bf16 %v70
    %v87 = vunpack.c.l.bf16 %v71
    %v88 = vunpack.c.l.bf16 %v72
    %v89 = vunpack.c.l.bf16 %v73
    %v90 = vunpack.c.l.bf16 %v74
    %v91 = vunpack.c.l.bf16 %v75
    %v92 = vstv %s59
    %v93 = vmul.f32 %v92, %v76
    %v94 = vmul.f32 %v92, %v77
    %v95 = vmul.f32 %v92, %v78
    %v96 = vmul.f32 %v92, %v79
    %v97 = vmul.f32 %v92, %v80
    %v98 = vmul.f32 %v92, %v81
    %v99 = vmul.f32 %v92, %v82
    %v100 = vmul.f32 %v92, %v83
    %v101 = vmul.f32 %v92, %v84
    %v102 = vmul.f32 %v92, %v85
    %v103 = vmul.f32 %v92, %v86
    %v104 = vmul.f32 %v92, %v87
    %v105 = vmul.f32 %v92, %v88
    %v106 = vmul.f32 %v92, %v89
    %v107 = vmul.f32 %v92, %v90
    %v108 = vmul.f32 %v92, %v91
    %s109 = sld [smem:[#allocation3 + $0x1]]
    %s110 = scalar_lea.vmem [#allocation4], 64
    %v111 = vld [vmem:[%s110] sm:$0xf]
    %v112 = vld [vmem:[%s110 + $0x4] sm:$0xf]
    %v113 = vld [vmem:[%s110 + $0x8] sm:$0xf]
    %v114 = vld [vmem:[%s110 + $0xc] sm:$0xf]
    %v115 = vld [vmem:[%s110 + $0x10] sm:$0xf]
    %v116 = vld [vmem:[%s110 + $0x14] sm:$0xf]
    %v117 = vld [vmem:[%s110 + $0x18] sm:$0xf]
    %v118 = vld [vmem:[%s110 + $0x1c] sm:$0xf]
    %v119 = vld [vmem:[%s110 + $0x20] sm:$0xf]
    %v120 = vld [vmem:[%s110 + $0x24] sm:$0xf]
    %v121 = vld [vmem:[%s110 + $0x28] sm:$0xf]
    %v122 = vld [vmem:[%s110 + $0x2c] sm:$0xf]
    %v123 = vld [vmem:[%s110 + $0x30] sm:$0xf]
    %v124 = vld [vmem:[%s110 + $0x34] sm:$0xf]
    %v125 = vld [vmem:[%s110 + $0x38] sm:$0xf]
    %v126 = vld [vmem:[%s110 + $0x3c] sm:$0xf]
    %v127 = vunpack.c.l.bf16 %v111
    %v128 = vunpack.c.l.bf16 %v112
    %v129 = vunpack.c.l.bf16 %v113
    %v130 = vunpack.c.l.bf16 %v114
    %v131 = vunpack.c.l.bf16 %v115
    %v132 = vunpack.c.l.bf16 %v116
    %v133 = vunpack.c.l.bf16 %v117
    %v134 = vunpack.c.l.bf16 %v118
    %v135 = vunpack.c.l.bf16 %v119
    %v136 = vunpack.c.l.bf16 %v120
    %v137 = vunpack.c.l.bf16 %v121
    %v138 = vunpack.c.l.bf16 %v122
    %v139 = vunpack.c.l.bf16 %v123
    %v140 = vunpack.c.l.bf16 %v124
    %v141 = vunpack.c.l.bf16 %v125
    %v142 = vunpack.c.l.bf16 %v126
    %v143 = vstv %s109
    %v144 = vmul.f32 %v143, %v127
    %v145 = vmul.f32 %v143, %v128
    %v146 = vmul.f32 %v143, %v129
    %v147 = vmul.f32 %v143, %v130
    %v148 = vmul.f32 %v143, %v131
    %v149 = vmul.f32 %v143, %v132
    %v150 = vmul.f32 %v143, %v133
    %v151 = vmul.f32 %v143, %v134
    %v152 = vmul.f32 %v143, %v135
    %v153 = vmul.f32 %v143, %v136
    %v154 = vmul.f32 %v143, %v137
    %v155 = vmul.f32 %v143, %v138
    %v156 = vmul.f32 %v143, %v139
    %v157 = vmul.f32 %v143, %v140
    %v158 = vmul.f32 %v143, %v141
    %v159 = vmul.f32 %v143, %v142
    %v160 = vadd.f32 %v93, %v144
    %v161 = vadd.f32 %v94, %v145
    %v162 = vadd.f32 %v95, %v146
    %v163 = vadd.f32 %v96, %v147
    %v164 = vadd.f32 %v97, %v148
    %v165 = vadd.f32 %v98, %v149
    %v166 = vadd.f32 %v99, %v150
    %v167 = vadd.f32 %v100, %v151
    %v168 = vadd.f32 %v101, %v152
    %v169 = vadd.f32 %v102, %v153
    %v170 = vadd.f32 %v103, %v154
    %v171 = vadd.f32 %v104, %v155
    %v172 = vadd.f32 %v105, %v156
    %v173 = vadd.f32 %v106, %v157
    %v174 = vadd.f32 %v107, %v158
    %v175 = vadd.f32 %v108, %v159
    %s176 = sld [smem:[#allocation3 + $0x2]]
    %s177 = scalar_lea.vmem [#allocation4], 128
    %v178 = vld [vmem:[%s177] sm:$0xf]
    %v179 = vld [vmem:[%s177 + $0x4] sm:$0xf]
    %v180 = vld [vmem:[%s177 + $0x8] sm:$0xf]
    %v181 = vld [vmem:[%s177 + $0xc] sm:$0xf]
    %v182 = vld [vmem:[%s177 + $0x10] sm:$0xf]
    %v183 = vld [vmem:[%s177 + $0x14] sm:$0xf]
    %v184 = vld [vmem:[%s177 + $0x18] sm:$0xf]
    %v185 = vld [vmem:[%s177 + $0x1c] sm:$0xf]
    %v186 = vld [vmem:[%s177 + $0x20] sm:$0xf]
    %v187 = vld [vmem:[%s177 + $0x24] sm:$0xf]
    %v188 = vld [vmem:[%s177 + $0x28] sm:$0xf]
    %v189 = vld [vmem:[%s177 + $0x2c] sm:$0xf]
    %v190 = vld [vmem:[%s177 + $0x30] sm:$0xf]
    %v191 = vld [vmem:[%s177 + $0x34] sm:$0xf]
    %v192 = vld [vmem:[%s177 + $0x38] sm:$0xf]
    %v193 = vld [vmem:[%s177 + $0x3c] sm:$0xf]
    %v194 = vunpack.c.l.bf16 %v178
    %v195 = vunpack.c.l.bf16 %v179
    %v196 = vunpack.c.l.bf16 %v180
    %v197 = vunpack.c.l.bf16 %v181
    %v198 = vunpack.c.l.bf16 %v182
    %v199 = vunpack.c.l.bf16 %v183
    %v200 = vunpack.c.l.bf16 %v184
    %v201 = vunpack.c.l.bf16 %v185
    %v202 = vunpack.c.l.bf16 %v186
    %v203 = vunpack.c.l.bf16 %v187
    %v204 = vunpack.c.l.bf16 %v188
    %v205 = vunpack.c.l.bf16 %v189
    %v206 = vunpack.c.l.bf16 %v190
    %v207 = vunpack.c.l.bf16 %v191
    %v208 = vunpack.c.l.bf16 %v192
    %v209 = vunpack.c.l.bf16 %v193
    %v210 = vstv %s176
    %v211 = vmul.f32 %v210, %v194
    %v212 = vmul.f32 %v210, %v195
    %v213 = vmul.f32 %v210, %v196
    %v214 = vmul.f32 %v210, %v197
    %v215 = vmul.f32 %v210, %v198
    %v216 = vmul.f32 %v210, %v199
    %v217 = vmul.f32 %v210, %v200
    %v218 = vmul.f32 %v210, %v201
    %v219 = vmul.f32 %v210, %v202
    %v220 = vmul.f32 %v210, %v203
    %v221 = vmul.f32 %v210, %v204
    %v222 = vmul.f32 %v210, %v205
    %v223 = vmul.f32 %v210, %v206
    %v224 = vmul.f32 %v210, %v207
    %v225 = vmul.f32 %v210, %v208
    %v226 = vmul.f32 %v210, %v209
    %v227 = vadd.f32 %v160, %v211
    %v228 = vadd.f32 %v161, %v212
    %v229 = vadd.f32 %v162, %v213
    %v230 = vadd.f32 %v163, %v214
    %v231 = vadd.f32 %v164, %v215
    %v232 = vadd.f32 %v165, %v216
    %v233 = vadd.f32 %v166, %v217
    %v234 = vadd.f32 %v167, %v218
    %v235 = vadd.f32 %v168, %v219
    %v236 = vadd.f32 %v169, %v220
    %v237 = vadd.f32 %v170, %v221
    %v238 = vadd.f32 %v171, %v222
    %v239 = vadd.f32 %v172, %v223
    %v240 = vadd.f32 %v173, %v224
    %v241 = vadd.f32 %v174, %v225
    %v242 = vadd.f32 %v175, %v226
    %v243 = vpack.c.bf16 %v228, %v227
    %v244 = vpack.c.bf16 %v230, %v229
    %v245 = vpack.c.bf16 %v232, %v231
    %v246 = vpack.c.bf16 %v234, %v233
    %v247 = vpack.c.bf16 %v236, %v235
    %v248 = vpack.c.bf16 %v238, %v237
    %v249 = vpack.c.bf16 %v240, %v239
    %v250 = vpack.c.bf16 %v242, %v241
    %v259 = vunpack.c.l.b16 %v243
    %v260 = vunpack.c.h.b16 %v243
    %v261 = vunpack.c.l.b16 %v244
    %v262 = vunpack.c.h.b16 %v244
    %v263 = vunpack.c.l.b16 %v245
    %v264 = vunpack.c.h.b16 %v245
    %v265 = vunpack.c.l.b16 %v246
    %v266 = vunpack.c.h.b16 %v246
    %v267 = vunpack.c.l.b16 %v247
    %v268 = vunpack.c.h.b16 %v247
    %v269 = vunpack.c.l.b16 %v248
    %v270 = vunpack.c.h.b16 %v248
    %v271 = vunpack.c.l.b16 %v249
    %v272 = vunpack.c.h.b16 %v249
    %v273 = vunpack.c.l.b16 %v250
    %v274 = vunpack.c.h.b16 %v250
    %v275 = vpack.c.b16 %v259, %v259
    %v276 = vpack.c.b16 %v260, %v260
    %v277 = vpack.c.b16 %v261, %v261
    %v278 = vpack.c.b16 %v262, %v262
    %v279 = vpack.c.b16 %v263, %v263
    %v280 = vpack.c.b16 %v264, %v264
    %v281 = vpack.c.b16 %v265, %v265
    %v282 = vpack.c.b16 %v266, %v266
    %v283 = vpack.c.b16 %v267, %v267
    %v284 = vpack.c.b16 %v268, %v268
    %v285 = vpack.c.b16 %v269, %v269
    %v286 = vpack.c.b16 %v270, %v270
    %v287 = vpack.c.b16 %v271, %v271
    %v288 = vpack.c.b16 %v272, %v272
    %v289 = vpack.c.b16 %v273, %v273
    %v290 = vpack.c.b16 %v274, %v274
    %307 = vst [vmem:[#allocation9] sm:$0xf] %v275
    %308 = vst [vmem:[#allocation9 + $0x4] sm:$0xf] %v276
    %309 = vst [vmem:[#allocation9 + $0x8] sm:$0xf] %v277
    %310 = vst [vmem:[#allocation9 + $0xc] sm:$0xf] %v278
    %311 = vst [vmem:[#allocation9 + $0x10] sm:$0xf] %v279
    %312 = vst [vmem:[#allocation9 + $0x14] sm:$0xf] %v280
    %313 = vst [vmem:[#allocation9 + $0x18] sm:$0xf] %v281
    %314 = vst [vmem:[#allocation9 + $0x1c] sm:$0xf] %v282
    %315 = vst [vmem:[#allocation9 + $0x20] sm:$0xf] %v283
    %316 = vst [vmem:[#allocation9 + $0x24] sm:$0xf] %v284
    %317 = vst [vmem:[#allocation9 + $0x28] sm:$0xf] %v285
    %318 = vst [vmem:[#allocation9 + $0x2c] sm:$0xf] %v286
    %319 = vst [vmem:[#allocation9 + $0x30] sm:$0xf] %v287
    %320 = vst [vmem:[#allocation9 + $0x34] sm:$0xf] %v288
    %321 = vst [vmem:[#allocation9 + $0x38] sm:$0xf] %v289
    %322 = vst [vmem:[#allocation9 + $0x3c] sm:$0xf] %v290
    %s323 = sld [smem:[#allocation3]]
    %v324 = vld [vmem:[%s2] sm:$0x1]
    %v325 = vunpack.c.l.bf16 %v324
    %v326 = vstv %s323
    %v327 = vmul.f32 %v326, %v325
    %s328 = sld [smem:[#allocation3 + $0x1]]
    %s329 = scalar_lea.vmem %s2, 1
    %v330 = vld [vmem:[%s329] sm:$0x1]
    %v331 = vunpack.c.l.bf16 %v330
    %v332 = vstv %s328
    %v333 = vmul.f32 %v332, %v331
    %v334 = vadd.f32 %v327, %v333
    %s335 = sld [smem:[#allocation3 + $0x2]]
    %s336 = scalar_lea.vmem %s2, 2
    %v337 = vld [vmem:[%s336] sm:$0x1]
    %v338 = vunpack.c.l.bf16 %v337
    %v339 = vstv %s335
    %v340 = vmul.f32 %v339, %v338
    %v341 = vadd.f32 %v334, %v340
    %342 = vst [vmem:[#allocation10] sm:$0x1] %v341
    %s343 = sld [smem:[#allocation3]]
    %v344 = vld [vmem:[#allocation7] sm:$0xf]
    %v345 = vld [vmem:[#allocation7 + $0x4] sm:$0xf]
    %v346 = vld [vmem:[#allocation7 + $0x8] sm:$0xf]
    %v347 = vld [vmem:[#allocation7 + $0xc] sm:$0xf]
    %v348 = vld [vmem:[#allocation7 + $0x10] sm:$0xf]
    %v349 = vld [vmem:[#allocation7 + $0x14] sm:$0xf]
    %v350 = vld [vmem:[#allocation7 + $0x18] sm:$0xf]
    %v351 = vld [vmem:[#allocation7 + $0x1c] sm:$0xf]
    %v352 = vld [vmem:[#allocation7 + $0x20] sm:$0xf]
    %v353 = vld [vmem:[#allocation7 + $0x24] sm:$0xf]
    %v354 = vld [vmem:[#allocation7 + $0x28] sm:$0xf]
    %v355 = vld [vmem:[#allocation7 + $0x2c] sm:$0xf]
    %v356 = vld [vmem:[#allocation7 + $0x30] sm:$0xf]
    %v357 = vld [vmem:[#allocation7 + $0x34] sm:$0xf]
    %v358 = vld [vmem:[#allocation7 + $0x38] sm:$0xf]
    %v359 = vld [vmem:[#allocation7 + $0x3c] sm:$0xf]
    %v360 = vunpack.c.l.bf16 %v344
    %v361 = vunpack.c.l.bf16 %v345
    %v362 = vunpack.c.l.bf16 %v346
    %v363 = vunpack.c.l.bf16 %v347
    %v364 = vunpack.c.l.bf16 %v348
    %v365 = vunpack.c.l.bf16 %v349
    %v366 = vunpack.c.l.bf16 %v350
    %v367 = vunpack.c.l.bf16 %v351
    %v368 = vunpack.c.l.bf16 %v352
    %v369 = vunpack.c.l.bf16 %v353
    %v370 = vunpack.c.l.bf16 %v354
    %v371 = vunpack.c.l.bf16 %v355
    %v372 = vunpack.c.l.bf16 %v356
    %v373 = vunpack.c.l.bf16 %v357
    %v374 = vunpack.c.l.bf16 %v358
    %v375 = vunpack.c.l.bf16 %v359
    %v376 = vstv %s343
    %v377 = vmul.f32 %v376, %v360
    %v378 = vmul.f32 %v376, %v361
    %v379 = vmul.f32 %v376, %v362
    %v380 = vmul.f32 %v376, %v363
    %v381 = vmul.f32 %v376, %v364
    %v382 = vmul.f32 %v376, %v365
    %v383 = vmul.f32 %v376, %v366
    %v384 = vmul.f32 %v376, %v367
    %v385 = vmul.f32 %v376, %v368
    %v386 = vmul.f32 %v376, %v369
    %v387 = vmul.f32 %v376, %v370
    %v388 = vmul.f32 %v376, %v371
    %v389 = vmul.f32 %v376, %v372
    %v390 = vmul.f32 %v376, %v373
    %v391 = vmul.f32 %v376, %v374
    %v392 = vmul.f32 %v376, %v375
    %s393 = sld [smem:[#allocation3 + $0x1]]
    %s394 = scalar_lea.vmem [#allocation7], 64
    %v395 = vld [vmem:[%s394] sm:$0xf]
    %v396 = vld [vmem:[%s394 + $0x4] sm:$0xf]
    %v397 = vld [vmem:[%s394 + $0x8] sm:$0xf]
    %v398 = vld [vmem:[%s394 + $0xc] sm:$0xf]
    %v399 = vld [vmem:[%s394 + $0x10] sm:$0xf]
    %v400 = vld [vmem:[%s394 + $0x14] sm:$0xf]
    %v401 = vld [vmem:[%s394 + $0x18] sm:$0xf]
    %v402 = vld [vmem:[%s394 + $0x1c] sm:$0xf]
    %v403 = vld [vmem:[%s394 + $0x20] sm:$0xf]
    %v404 = vld [vmem:[%s394 + $0x24] sm:$0xf]
    %v405 = vld [vmem:[%s394 + $0x28] sm:$0xf]
    %v406 = vld [vmem:[%s394 + $0x2c] sm:$0xf]
    %v407 = vld [vmem:[%s394 + $0x30] sm:$0xf]
    %v408 = vld [vmem:[%s394 + $0x34] sm:$0xf]
    %v409 = vld [vmem:[%s394 + $0x38] sm:$0xf]
    %v410 = vld [vmem:[%s394 + $0x3c] sm:$0xf]
    %v411 = vunpack.c.l.bf16 %v395
    %v412 = vunpack.c.l.bf16 %v396
    %v413 = vunpack.c.l.bf16 %v397
    %v414 = vunpack.c.l.bf16 %v398
    %v415 = vunpack.c.l.bf16 %v399
    %v416 = vunpack.c.l.bf16 %v400
    %v417 = vunpack.c.l.bf16 %v401
    %v418 = vunpack.c.l.bf16 %v402
    %v419 = vunpack.c.l.bf16 %v403
    %v420 = vunpack.c.l.bf16 %v404
    %v421 = vunpack.c.l.bf16 %v405
    %v422 = vunpack.c.l.bf16 %v406
    %v423 = vunpack.c.l.bf16 %v407
    %v424 = vunpack.c.l.bf16 %v408
    %v425 = vunpack.c.l.bf16 %v409
    %v426 = vunpack.c.l.bf16 %v410
    %v427 = vstv %s393
    %v428 = vmul.f32 %v427, %v411
    %v429 = vmul.f32 %v427, %v412
    %v430 = vmul.f32 %v427, %v413
    %v431 = vmul.f32 %v427, %v414
    %v432 = vmul.f32 %v427, %v415
    %v433 = vmul.f32 %v427, %v416
    %v434 = vmul.f32 %v427, %v417
    %v435 = vmul.f32 %v427, %v418
    %v436 = vmul.f32 %v427, %v419
    %v437 = vmul.f32 %v427, %v420
    %v438 = vmul.f32 %v427, %v421
    %v439 = vmul.f32 %v427, %v422
    %v440 = vmul.f32 %v427, %v423
    %v441 = vmul.f32 %v427, %v424
    %v442 = vmul.f32 %v427, %v425
    %v443 = vmul.f32 %v427, %v426
    %v444 = vadd.f32 %v377, %v428
    %v445 = vadd.f32 %v378, %v429
    %v446 = vadd.f32 %v379, %v430
    %v447 = vadd.f32 %v380, %v431
    %v448 = vadd.f32 %v381, %v432
    %v449 = vadd.f32 %v382, %v433
    %v450 = vadd.f32 %v383, %v434
    %v451 = vadd.f32 %v384, %v435
    %v452 = vadd.f32 %v385, %v436
    %v453 = vadd.f32 %v386, %v437
    %v454 = vadd.f32 %v387, %v438
    %v455 = vadd.f32 %v388, %v439
    %v456 = vadd.f32 %v389, %v440
    %v457 = vadd.f32 %v390, %v441
    %v458 = vadd.f32 %v391, %v442
    %v459 = vadd.f32 %v392, %v443
    %s460 = sld [smem:[#allocation3 + $0x2]]
    %s461 = scalar_lea.vmem [#allocation7], 128
    %v462 = vld [vmem:[%s461] sm:$0xf]
    %v463 = vld [vmem:[%s461 + $0x4] sm:$0xf]
    %v464 = vld [vmem:[%s461 + $0x8] sm:$0xf]
    %v465 = vld [vmem:[%s461 + $0xc] sm:$0xf]
    %v466 = vld [vmem:[%s461 + $0x10] sm:$0xf]
    %v467 = vld [vmem:[%s461 + $0x14] sm:$0xf]
    %v468 = vld [vmem:[%s461 + $0x18] sm:$0xf]
    %v469 = vld [vmem:[%s461 + $0x1c] sm:$0xf]
    %v470 = vld [vmem:[%s461 + $0x20] sm:$0xf]
    %v471 = vld [vmem:[%s461 + $0x24] sm:$0xf]
    %v472 = vld [vmem:[%s461 + $0x28] sm:$0xf]
    %v473 = vld [vmem:[%s461 + $0x2c] sm:$0xf]
    %v474 = vld [vmem:[%s461 + $0x30] sm:$0xf]
    %v475 = vld [vmem:[%s461 + $0x34] sm:$0xf]
    %v476 = vld [vmem:[%s461 + $0x38] sm:$0xf]
    %v477 = vld [vmem:[%s461 + $0x3c] sm:$0xf]
    %v478 = vunpack.c.l.bf16 %v462
    %v479 = vunpack.c.l.bf16 %v463
    %v480 = vunpack.c.l.bf16 %v464
    %v481 = vunpack.c.l.bf16 %v465
    %v482 = vunpack.c.l.bf16 %v466
    %v483 = vunpack.c.l.bf16 %v467
    %v484 = vunpack.c.l.bf16 %v468
    %v485 = vunpack.c.l.bf16 %v469
    %v486 = vunpack.c.l.bf16 %v470
    %v487 = vunpack.c.l.bf16 %v471
    %v488 = vunpack.c.l.bf16 %v472
    %v489 = vunpack.c.l.bf16 %v473
    %v490 = vunpack.c.l.bf16 %v474
    %v491 = vunpack.c.l.bf16 %v475
    %v492 = vunpack.c.l.bf16 %v476
    %v493 = vunpack.c.l.bf16 %v477
    %v494 = vstv %s460
    %v495 = vmul.f32 %v494, %v478
    %v496 = vmul.f32 %v494, %v479
    %v497 = vmul.f32 %v494, %v480
    %v498 = vmul.f32 %v494, %v481
    %v499 = vmul.f32 %v494, %v482
    %v500 = vmul.f32 %v494, %v483
    %v501 = vmul.f32 %v494, %v484
    %v502 = vmul.f32 %v494, %v485
    %v503 = vmul.f32 %v494, %v486
    %v504 = vmul.f32 %v494, %v487
    %v505 = vmul.f32 %v494, %v488
    %v506 = vmul.f32 %v494, %v489
    %v507 = vmul.f32 %v494, %v490
    %v508 = vmul.f32 %v494, %v491
    %v509 = vmul.f32 %v494, %v492
    %v510 = vmul.f32 %v494, %v493
    %v511 = vadd.f32 %v444, %v495
    %v512 = vadd.f32 %v445, %v496
    %v513 = vadd.f32 %v446, %v497
    %v514 = vadd.f32 %v447, %v498
    %v515 = vadd.f32 %v448, %v499
    %v516 = vadd.f32 %v449, %v500
    %v517 = vadd.f32 %v450, %v501
    %v518 = vadd.f32 %v451, %v502
    %v519 = vadd.f32 %v452, %v503
    %v520 = vadd.f32 %v453, %v504
    %v521 = vadd.f32 %v454, %v505
    %v522 = vadd.f32 %v455, %v506
    %v523 = vadd.f32 %v456, %v507
    %v524 = vadd.f32 %v457, %v508
    %v525 = vadd.f32 %v458, %v509
    %v526 = vadd.f32 %v459, %v510
    %v527 = vpack.c.bf16 %v512, %v511
    %v528 = vpack.c.bf16 %v514, %v513
    %v529 = vpack.c.bf16 %v516, %v515
    %v530 = vpack.c.bf16 %v518, %v517
    %v531 = vpack.c.bf16 %v520, %v519
    %v532 = vpack.c.bf16 %v522, %v521
    %v533 = vpack.c.bf16 %v524, %v523
    %v534 = vpack.c.bf16 %v526, %v525
    %v543 = vunpack.c.l.b16 %v527
    %v544 = vunpack.c.h.b16 %v527
    %v545 = vunpack.c.l.b16 %v528
    %v546 = vunpack.c.h.b16 %v528
    %v547 = vunpack.c.l.b16 %v529
    %v548 = vunpack.c.h.b16 %v529
    %v549 = vunpack.c.l.b16 %v530
    %v550 = vunpack.c.h.b16 %v530
    %v551 = vunpack.c.l.b16 %v531
    %v552 = vunpack.c.h.b16 %v531
    %v553 = vunpack.c.l.b16 %v532
    %v554 = vunpack.c.h.b16 %v532
    %v555 = vunpack.c.l.b16 %v533
    %v556 = vunpack.c.h.b16 %v533
    %v557 = vunpack.c.l.b16 %v534
    %v558 = vunpack.c.h.b16 %v534
    %v559 = vpack.c.b16 %v543, %v543
    %v560 = vpack.c.b16 %v544, %v544
    %v561 = vpack.c.b16 %v545, %v545
    %v562 = vpack.c.b16 %v546, %v546
    %v563 = vpack.c.b16 %v547, %v547
    %v564 = vpack.c.b16 %v548, %v548
    %v565 = vpack.c.b16 %v549, %v549
    %v566 = vpack.c.b16 %v550, %v550
    %v567 = vpack.c.b16 %v551, %v551
    %v568 = vpack.c.b16 %v552, %v552
    %v569 = vpack.c.b16 %v553, %v553
    %v570 = vpack.c.b16 %v554, %v554
    %v571 = vpack.c.b16 %v555, %v555
    %v572 = vpack.c.b16 %v556, %v556
    %v573 = vpack.c.b16 %v557, %v557
    %v574 = vpack.c.b16 %v558, %v558
    %591 = vst [vmem:[#allocation12] sm:$0xf] %v559
    %592 = vst [vmem:[#allocation12 + $0x4] sm:$0xf] %v560
    %593 = vst [vmem:[#allocation12 + $0x8] sm:$0xf] %v561
    %594 = vst [vmem:[#allocation12 + $0xc] sm:$0xf] %v562
    %595 = vst [vmem:[#allocation12 + $0x10] sm:$0xf] %v563
    %596 = vst [vmem:[#allocation12 + $0x14] sm:$0xf] %v564
    %597 = vst [vmem:[#allocation12 + $0x18] sm:$0xf] %v565
    %598 = vst [vmem:[#allocation12 + $0x1c] sm:$0xf] %v566
    %599 = vst [vmem:[#allocation12 + $0x20] sm:$0xf] %v567
    %600 = vst [vmem:[#allocation12 + $0x24] sm:$0xf] %v568
    %601 = vst [vmem:[#allocation12 + $0x28] sm:$0xf] %v569
    %602 = vst [vmem:[#allocation12 + $0x2c] sm:$0xf] %v570
    %603 = vst [vmem:[#allocation12 + $0x30] sm:$0xf] %v571
    %604 = vst [vmem:[#allocation12 + $0x34] sm:$0xf] %v572
    %605 = vst [vmem:[#allocation12 + $0x38] sm:$0xf] %v573
    %606 = vst [vmem:[#allocation12 + $0x3c] sm:$0xf] %v574
    %s607 = sld [smem:[#allocation3]]
    %v608 = vld [vmem:[%s4] sm:$0x1]
    %v609 = vunpack.c.l.bf16 %v608
    %v610 = vstv %s607
    %v611 = vmul.f32 %v610, %v609
    %s612 = sld [smem:[#allocation3 + $0x1]]
    %s613 = scalar_lea.vmem %s4, 1
    %v614 = vld [vmem:[%s613] sm:$0x1]
    %v615 = vunpack.c.l.bf16 %v614
    %v616 = vstv %s612
    %v617 = vmul.f32 %v616, %v615
    %v618 = vadd.f32 %v611, %v617
    %s619 = sld [smem:[#allocation3 + $0x2]]
    %s620 = scalar_lea.vmem %s4, 2
    %v621 = vld [vmem:[%s620] sm:$0x1]
    %v622 = vunpack.c.l.bf16 %v621
    %v623 = vstv %s619
    %v624 = vmul.f32 %v623, %v622
    %v625 = vadd.f32 %v618, %v624
    %626 = vst [vmem:[#allocation13] sm:$0x1] %v625
    // Predicated region
    $region26: #{merge_params.1} parent=1 // pred_check
      _
    $region27: #{merge_params.1} parent=1 // pred_check_branch
      %628 = sbr.rel (0) target = $region29
    $region28: #{merge_params.1} parent=1 // pred_region
      %s630 = ssub.s32 1024, 1024
      %631 = vsyncadd [#allocation6], %s630
      %s632 = sshll.u32 [#allocation9], 4
      %s633 = int_to_ptr.vmem [resolvable:$true] %s632
      %638 = dma.vmem_to_hbm [thread:$0]  %s633, 1024, %s5, [#allocation6], 64, 64, 4
    $region29: #{merge_params.1} parent=1 // pred_fallthru
      _
    // Predicated region
    $region30: #{merge_params.1} parent=1 // pred_check
      _
    $region31: #{merge_params.1} parent=1 // pred_check_branch
      %640 = sbr.rel (0) target = $region33
    $region32: #{merge_params.1} parent=1 // pred_region
      %s642 = ssub.s32 16, 16
      %643 = vsyncadd [#allocation11], %s642
      %s645 = sshll.u32 [#allocation10], 4
      %s646 = int_to_ptr.vmem [resolvable:$true] %s645
      %648 = dma.vmem_to_hbm [thread:$0]  %s646, 16, %s6, [#allocation11]
    $region33: #{merge_params.1} parent=1 // pred_fallthru
      _
    // Predicated region
    $region34: #{merge_params.1} parent=1 // pred_check
      _
    $region35: #{merge_params.1} parent=1 // pred_check_branch
      %650 = sbr.rel (0) target = $region37
    $region36: #{merge_params.1} parent=1 // pred_region
      %s652 = ssub.s32 1024, 1024
      %653 = vsyncadd [#allocation11], %s652
      %s654 = sshll.u32 [#allocation12], 4
      %s655 = int_to_ptr.vmem [resolvable:$true] %s654
      %660 = dma.vmem_to_hbm [thread:$0]  %s655, 1024, %s7, [#allocation11], 64, 64, 4
    $region37: #{merge_params.1} parent=1 // pred_fallthru
      _
    // Predicated region
    $region38: #{merge_params.1} parent=1 // pred_check
      _
    $region39: #{merge_params.1} parent=1 // pred_check_branch
      %662 = sbr.rel (0) target = $region41
    $region40: #{merge_params.1} parent=1 // pred_region
      %s664 = ssub.s32 16, 16
      %665 = vsyncadd [#allocation14], %s664
      %s667 = sshll.u32 [#allocation13], 4
      %s668 = int_to_ptr.vmem [resolvable:$true] %s667
      %670 = dma.vmem_to_hbm [thread:$0]  %s668, 16, %s8, [#allocation14]
    $region41: #{merge_params.1} parent=1 // pred_fallthru
      _
    // Predicated region
    $region42: #{merge_params.1} parent=1 // pred_check
      _
    $region43: #{merge_params.1} parent=1 // pred_check_branch
      %672 = sbr.rel (0) target = $region45
    $region44: #{merge_params.1} parent=1 // pred_region
      %673 = dma.done [#allocation6], 1024
    $region45: #{merge_params.1} parent=1 // pred_fallthru
      _
    // Predicated region
    $region46: #{merge_params.1} parent=1 // pred_check
      _
    $region47: #{merge_params.1} parent=1 // pred_check_branch
      %675 = sbr.rel (0) target = $region49
    $region48: #{merge_params.1} parent=1 // pred_region
      %676 = dma.done [#allocation11], 16
    $region49: #{merge_params.1} parent=1 // pred_fallthru
      _
    // Predicated region
    $region50: #{merge_params.1} parent=1 // pred_check
      _
    $region51: #{merge_params.1} parent=1 // pred_check_branch
      %678 = sbr.rel (0) target = $region53
    $region52: #{merge_params.1} parent=1 // pred_region
      %679 = dma.done [#allocation11], 1024
    $region53: #{merge_params.1} parent=1 // pred_fallthru
      _
    // Predicated region
    $region54: #{merge_params.1} parent=1 // pred_check
      _
    $region55: #{merge_params.1} parent=1 // pred_check_branch
      %681 = sbr.rel (0) target = $region57
    $region56: #{merge_params.1} parent=1 // pred_region
      %682 = dma.done [#allocation14], 16
    $region57: #{merge_params.1} parent=1 // pred_fallthru
      _
    %683 = vsyncpa [#allocation5], 1
    %684 = vsyncpa [#allocation8], 1
    %685 = vsyncpa [#allocation6], 1
    %686 = vsyncpa [#allocation11], 1
    %687 = vsyncpa [#allocation14], 1

</llo_original>
